<compile_context>
chip_gen: v7x
topology: tpu7x:2x2x1
jax: 0.10.0
libtpu: 0.0.40
codegen_flags: <defaults>
</compile_context>

<pallas_src>
import jax
import jax.numpy as jnp
from jax import lax
from jax.experimental import pallas as pl
from jax.experimental.pallas import tpu as pltpu


def _round_up(x: int, m: int) -> int:
    return ((x + m - 1) // m) * m


def _masked_avg_kernel(data_ref, mask_ref, out_ref, num_acc, den_acc):
    # data_ref: (TB, TS, H)  mask_ref: (TB, TS)  out_ref: (TB, H)
    # num_acc:  (TB, 1, H) f32 scratch   den_acc: (TB, 1) f32 scratch
    s_idx = pl.program_id(1)

    @pl.when(s_idx == 0)
    def _():
        num_acc[...] = jnp.zeros_like(num_acc)
        den_acc[...] = jnp.zeros_like(den_acc)

    d = data_ref[...]                                  # (TB, TS, H)
    m32 = mask_ref[...].astype(jnp.float32)            # (TB, TS)
    m = m32.astype(d.dtype)[:, None, :]                # (TB, 1, TS)  (0/1 exact in bf16)

    # Batched (1, TS) x (TS, H) matmuls on the MXU, accumulated in f32.
    num_acc[...] += lax.dot_general(
        m, d,
        dimension_numbers=(((2,), (1,)), ((0,), (0,))),
        preferred_element_type=jnp.float32)            # (TB, 1, H)

    # Mask count, accumulated in f32 (exact for 0/1 mask).
    den_acc[...] += jnp.sum(m32, axis=1, keepdims=True)  # (TB, 1)

    @pl.when(s_idx == pl.num_programs(1) - 1)
    def _():
        num = num_acc[...][:, 0, :]                    # (TB, H) f32
        den = den_acc[...]                             # (TB, 1) f32
        # Explicit zero-denominator guard: same semantics as `out[out != out] = 0`
        # but does not rely on NaN propagation surviving compiler rewrites.
        out = jnp.where(den == 0.0, 0.0, num / den)
        out_ref[...] = out.astype(out_ref.dtype)


def masked_average(data: jax.Array, mask: jax.Array, *, tb: int = 8, ts: int = 512) -> jax.Array:
    """data: (B, S, H) float, mask: (B, S) float/0-1.  Returns (B, H)."""
    B, S, H = data.shape
    assert mask.shape == (B, S)

    # --- tile-size selection ---------------------------------------------
    Hp = _round_up(H, 128)                      # lane-dense output, whole H per block
    itemsize = data.dtype.itemsize
    # Keep one data buffer around <= ~4 MiB so 2x buffering + scratch stays a few MiB
    # (fits comfortably on v5e/v6e and within v7x's 64 MiB physical VMEM).
    ts_budget = (4 * 1024 * 1024) // max(1, tb * Hp * itemsize)
    ts_budget = max(128, (ts_budget // 128) * 128)
    ts = min(ts, ts_budget)
    ts = min(ts, _round_up(S, 128))             # don't over-pad tiny sequences
    tb = min(tb, _round_up(B, 8))

    Bp = _round_up(B, tb)
    Sp = _round_up(S, ts)

    # --- pad to tile multiples (zeros contribute nothing to num/den) -----
    if (Bp, Sp, Hp) != (B, S, H):
        data = jnp.pad(data, ((0, Bp - B), (0, Sp - S), (0, Hp - H)))
    if (Bp, Sp) != (B, S):
        mask = jnp.pad(mask, ((0, Bp - B), (0, Sp - S)))

    grid = (Bp // tb, Sp // ts)                 # (batch: parallel, seq: reduction)

    # --- explicit VMEM budget with headroom -------------------------------
    data_blk = tb * ts * Hp * itemsize
    mask_blk = tb * ts * mask.dtype.itemsize
    out_blk = tb * Hp * itemsize
    scratch_bytes = tb * Hp * 4 + tb * 128 * 4
    vmem_limit = 2 * (data_blk + mask_blk + out_blk) + scratch_bytes + (8 << 20)
    vmem_limit = int(min(max(vmem_limit, 16 << 20), 64 << 20))

    out = pl.pallas_call(
        _masked_avg_kernel,
        out_shape=jax.ShapeDtypeStruct((Bp, Hp), data.dtype),
        grid=grid,
        in_specs=[
            pl.BlockSpec((tb, ts, Hp), lambda b, s: (b, s, 0)),
            pl.BlockSpec((tb, ts), lambda b, s: (b, s)),
        ],
        # Output block is constant across the S axis -> resident accumulator target.
        out_specs=pl.BlockSpec((tb, Hp), lambda b, s: (b, 0)),
        scratch_shapes=[
            pltpu.VMEM((tb, 1, Hp), jnp.float32),   # numerator accumulator
            pltpu.VMEM((tb, 1), jnp.float32),       # denominator accumulator
        ],
        compiler_params=pltpu.CompilerParams(
            dimension_semantics=("parallel", "arbitrary"),
            vmem_limit_bytes=vmem_limit,
        ),
    )(data, mask)

    return out[:B, :H]


if __name__ == "__main__":
    key = jax.random.PRNGKey(0)
    B, S, H = 2, 8, 32

    kd, km = jax.random.split(key)
    data = jax.random.normal(kd, (B, S, H), dtype=jnp.float32)
    # mask: first batch has 5 valid positions, second batch has 0 valid positions
    # (exercises the 0/0 -> 0 path exactly like the PyTorch module).
    mask = jnp.zeros((B, S), dtype=jnp.float32)
    mask = mask.at[0, :5].set(1.0)

    out = jax.block_until_ready(masked_average(data, mask))

    # pure-JAX reference with identical semantics
    ref = (data * mask[:, :, None]).sum(1) / mask.sum(1)[:, None]
    ref = jnp.where(ref != ref, 0.0, ref)

    assert out.shape == (B, H)
    assert jnp.allclose(out, ref, atol=1e-5, rtol=1e-5), "mismatch vs reference"
    print("KERNEL_OK")
</pallas_src>

<mosaic_0001>
module attributes {stable_mosaic.version = 11 : i64} {
  func.func @_masked_avg_kernel(%arg0: i32, %arg1: i32, %arg2: memref<8x128x128xf32, #tpu.memory_space<vmem>>, %arg3: memref<8x128xf32, #tpu.memory_space<vmem>>, %arg4: memref<8x128xf32, #tpu.memory_space<vmem>>, %arg5: memref<8x1x128xf32, #tpu.memory_space<vmem>>, %arg6: memref<8x1xf32, #tpu.memory_space<vmem>>) attributes {dimension_semantics = [#tpu.dimension_semantics<parallel>, #tpu.dimension_semantics<arbitrary>], iteration_bounds = array<i64: 1, 1>, scalar_prefetch = 0 : i64, scratch_operands = 2 : i64, tpu.core_type = #tpu.core_type<tc>, window_params = [{transform_indices = @transform_0, window_bounds = array<i64: 8, 128, 128>}, {transform_indices = @transform_1, window_bounds = array<i64: 8, 128>}, {transform_indices = @transform_2, window_bounds = array<i64: 8, 128>}]} {
    %c0_i32 = arith.constant 0 : i32
    %0 = arith.cmpi eq, %arg1, %c0_i32 : i32
    %1 = arith.extui %0 : i1 to i32
    %c0_i32_0 = arith.constant 0 : i32
    %2 = arith.cmpi ne, %1, %c0_i32_0 : i32
    scf.if %2 {
      %cst_18 = arith.constant 0.000000e+00 : f32
      %18 = vector.broadcast %cst_18 : f32 to vector<8x1x128xf32>
      %c0_19 = arith.constant 0 : index
      %c0_20 = arith.constant 0 : index
      %c0_21 = arith.constant 0 : index
      %19 = vector.load %arg5[%c0_19, %c0_20, %c0_21] : memref<8x1x128xf32, #tpu.memory_space<vmem>>, vector<8x1x128xf32>
      tpu.vector_store %arg5[%c0_19, %c0_20, %c0_21], %18 {strides = array<i32>} : memref<8x1x128xf32, #tpu.memory_space<vmem>>, vector<8x1x128xf32>,
      %cst_22 = arith.constant 0.000000e+00 : f32
      %20 = vector.broadcast %cst_22 : f32 to vector<8x1xf32>
      %c0_23 = arith.constant 0 : index
      %c0_24 = arith.constant 0 : index
      %21 = vector.load %arg6[%c0_23, %c0_24] : memref<8x1xf32, #tpu.memory_space<vmem>>, vector<8x1xf32>
      tpu.vector_store %arg6[%c0_23, %c0_24], %20 {strides = array<i32>} : memref<8x1xf32, #tpu.memory_space<vmem>>, vector<8x1xf32>,
    } else {
    }
    %c0 = arith.constant 0 : index
    %c0_1 = arith.constant 0 : index
    %c0_2 = arith.constant 0 : index
    %3 = vector.load %arg2[%c0, %c0_1, %c0_2] : memref<8x128x128xf32, #tpu.memory_space<vmem>>, vector<8x128x128xf32>
    %c0_3 = arith.constant 0 : index
    %c0_4 = arith.constant 0 : index
    %4 = vector.load %arg3[%c0_3, %c0_4] : memref<8x128xf32, #tpu.memory_space<vmem>>, vector<8x128xf32>
    %5 = vector.shape_cast %4 : vector<8x128xf32> to vector<8x1x128xf32>
    %c0_5 = arith.constant 0 : index
    %c0_6 = arith.constant 0 : index
    %c0_7 = arith.constant 0 : index
    %6 = vector.load %arg5[%c0_5, %c0_6, %c0_7] : memref<8x1x128xf32, #tpu.memory_space<vmem>>, vector<8x1x128xf32>
    %cst = arith.constant dense<0.000000e+00> : vector<8x1x128xf32>
    %7 = tpu.matmul %5, %3, %cst {dimension_numbers = #tpu.dot_dimension_numbers<[2], [1], [1], [2], [0, 0, 0, 1, 1, 2], [0], [0]>} : vector<8x1x128xf32>, vector<8x128x128xf32>, vector<8x1x128xf32> -> vector<8x1x128xf32>
    %8 = arith.addf %6, %7 : vector<8x1x128xf32>
    %c0_8 = arith.constant 0 : index
    %c0_9 = arith.constant 0 : index
    %c0_10 = arith.constant 0 : index
    %9 = vector.load %arg5[%c0_8, %c0_9, %c0_10] : memref<8x1x128xf32, #tpu.memory_space<vmem>>, vector<8x1x128xf32>
    tpu.vector_store %arg5[%c0_8, %c0_9, %c0_10], %8 {strides = array<i32>} : memref<8x1x128xf32, #tpu.memory_space<vmem>>, vector<8x1x128xf32>,
    %c0_11 = arith.constant 0 : index
    %c0_12 = arith.constant 0 : index
    %10 = vector.load %arg6[%c0_11, %c0_12] : memref<8x1xf32, #tpu.memory_space<vmem>>, vector<8x1xf32>
    %cst_13 = arith.constant dense<0.000000e+00> : vector<8xf32>
    %11 = vector.multi_reduction <add>, %4, %cst_13 [1] : vector<8x128xf32> to vector<8xf32>
    %12 = vector.shape_cast %11 : vector<8xf32> to vector<8x1xf32>
    %13 = arith.addf %10, %12 : vector<8x1xf32>
    %c0_14 = arith.constant 0 : index
    %c0_15 = arith.constant 0 : index
    %14 = vector.load %arg6[%c0_14, %c0_15] : memref<8x1xf32, #tpu.memory_space<vmem>>, vector<8x1xf32>
    tpu.vector_store %arg6[%c0_14, %c0_15], %13 {strides = array<i32>} : memref<8x1xf32, #tpu.memory_space<vmem>>, vector<8x1xf32>,
    %c0_i32_16 = arith.constant 0 : i32
    %15 = arith.cmpi eq, %arg1, %c0_i32_16 : i32
    %16 = arith.extui %15 : i1 to i32
    %c0_i32_17 = arith.constant 0 : i32
    %17 = arith.cmpi ne, %16, %c0_i32_17 : i32
    scf.if %17 {
      %c0_18 = arith.constant 0 : index
      %c0_19 = arith.constant 0 : index
      %c0_20 = arith.constant 0 : index
      %18 = vector.load %arg5[%c0_18, %c0_19, %c0_20] : memref<8x1x128xf32, #tpu.memory_space<vmem>>, vector<8x1x128xf32>
      %19 = vector.shape_cast %18 : vector<8x1x128xf32> to vector<8x128xf32>
      %c0_21 = arith.constant 0 : index
      %c0_22 = arith.constant 0 : index
      %20 = vector.load %arg6[%c0_21, %c0_22] : memref<8x1xf32, #tpu.memory_space<vmem>>, vector<8x1xf32>
      %cst_23 = arith.constant 0.000000e+00 : f32
      %21 = vector.broadcast %cst_23 : f32 to vector<8x1xf32>
      %22 = arith.cmpf oeq, %20, %21 : vector<8x1xf32>
      %23 = vector.broadcast %20 : vector<8x1xf32> to vector<8x128xf32>
      %24 = arith.divf %19, %23 : vector<8x128xf32>
      %cst_24 = arith.constant 0.000000e+00 : f32
      %25 = vector.shape_cast %22 : vector<8x1xi1> to vector<8x1xi1>
      %26 = vector.broadcast %25 : vector<8x1xi1> to vector<8x128xi1>
      %27 = vector.broadcast %cst_24 : f32 to vector<8x128xf32>
      %28 = arith.select %26, %27, %24 : vector<8x128xi1>, vector<8x128xf32>
      %c0_25 = arith.constant 0 : index
      %c0_26 = arith.constant 0 : index
      %29 = vector.load %arg4[%c0_25, %c0_26] : memref<8x128xf32, #tpu.memory_space<vmem>>, vector<8x128xf32>
      tpu.vector_store %arg4[%c0_25, %c0_26], %28 {strides = array<i32>} : memref<8x128xf32, #tpu.memory_space<vmem>>, vector<8x128xf32>,
    } else {
    }
    return
  }
  func.func @transform_0(%arg0: i32, %arg1: i32) -> (i32, i32, i32) {
    %c0_i32 = arith.constant 0 : i32
    %c0_i32_0 = arith.constant 0 : i32
    return %arg0, %arg1, %c0_i32 : i32, i32, i32
  }
  func.func @transform_1(%arg0: i32, %arg1: i32) -> (i32, i32) {
    %c0_i32 = arith.constant 0 : i32
    return %arg0, %arg1 : i32, i32
  }
  func.func @transform_2(%arg0: i32, %arg1: i32) -> (i32, i32) {
    %c0_i32 = arith.constant 0 : i32
    %c0_i32_0 = arith.constant 0 : i32
    return %arg0, %c0_i32 : i32, i32
  }
}

</mosaic_0001>

<llo_original>
// kernel: tpu_custom_call.1
$region0: #{tpu_custom_call.1}
  #allocation0 [shape = 'u32[]', space=smem, size = 0x4, offset = 0x4, fixed_abs, tag = 'smem constant byte address 0x4 - core index']
  #allocation1 [shape = 'u32[144,128]{1,0:T(1,128)}', space=vmem, size = 0x12000, scoped, tag = 'internal scratch']
  #allocation2 [shape = 'f32[8,1,128]{2,1,0:T(1,128)}', space=vmem, size = 0x1000, scoped, tag = 'scratch operand']
  #allocation3 [shape = 'f32[8,1]{1,0:T(8,128)}', space=vmem, size = 0x1000, scoped, tag = 'scratch operand']
  %s0 = inlined_call_operand.hbm [shape: f32[8,128,128], index: 0, kind: input, shape index: {}]
  %s1 = inlined_call_operand.hbm [shape: f32[8,128], index: 1, kind: input, shape index: {}]
  %s2 = inlined_call_operand.hbm [shape: f32[8,128], index: 2, kind: output, shape index: {}]
  %s3 = sld [smem:[#allocation0]]
  $region34: #{tpu_custom_call.1} parent=0
    _
  %s5 = ssub.s32 1, %s3
  %s6 = scalar_select 0, %s5, %s3
  $region1: #{tpu_custom_call.1} parent=0
    #allocation4 [shape = 'u8[524288]{0}', space=vmem, size = 0x80000, scoped, tag = 'input window, operand 0, single buffered']
    #allocation5 [shape = 's32[1]{0}', space=sflag, size = 0x4, scoped, tag = 'scoped memory for tpu_custom_call.1']
    #allocation6 [shape = 's32[1]{0}', space=sflag, size = 0x4, scoped, tag = 'scoped memory for tpu_custom_call.1']
    #allocation7 [shape = 'u8[4096]{0}', space=vmem, size = 0x1000, scoped, tag = 'input window, operand 1, single buffered']
    #allocation8 [shape = 's32[1]{0}', space=sflag, size = 0x4, scoped, tag = 'scoped memory for tpu_custom_call.1']
    #allocation9 [shape = 'u8[4096]{0}', space=vmem, size = 0x1000, scoped, tag = 'output window, operand 0, single buffered']
    %7 = vsyncpa [#allocation5], 0
    %8 = vsyncpa [#allocation8], 0
    %9 = vsyncpa [#allocation6], 0
    // Predicated region
    $region2: #{tpu_custom_call.1} parent=1 // pred_check
      _
    $region3: #{tpu_custom_call.1} parent=1 // pred_check_branch
      %11 = sbr.rel (0) target = $region5
    $region4: #{tpu_custom_call.1} parent=1 // pred_region
      %s13 = ssub.s32 16384, 16384
      %14 = vsyncadd [#allocation5], %s13
      %s15 = sshll.u32 [#allocation4], 4
      %s16 = int_to_ptr.vmem [resolvable:$true] %s15
      %21 = dma.hbm_to_vmem [thread:$0]  %s0, 16384, %s16, [#allocation5], 128, 128, 8
    $region5: #{tpu_custom_call.1} parent=1 // pred_fallthru
      _
    // Predicated region
    $region6: #{tpu_custom_call.1} parent=1 // pred_check
      _
    $region7: #{tpu_custom_call.1} parent=1 // pred_check_branch
      %23 = sbr.rel (0) target = $region9
    $region8: #{tpu_custom_call.1} parent=1 // pred_region
      %s25 = ssub.s32 128, 128
      %26 = vsyncadd [#allocation8], %s25
      %s28 = sshll.u32 [#allocation7], 4
      %s29 = int_to_ptr.vmem [resolvable:$true] %s28
      %31 = dma.hbm_to_vmem [thread:$0]  %s1, 128, %s29, [#allocation8]
    $region9: #{tpu_custom_call.1} parent=1 // pred_fallthru
      _
    // Predicated region
    $region10: #{tpu_custom_call.1} parent=1 // pred_check
      _
    $region11: #{tpu_custom_call.1} parent=1 // pred_check_branch
      %33 = sbr.rel (0) target = $region13
    $region12: #{tpu_custom_call.1} parent=1 // pred_region
      %34 = dma.done [#allocation5], 16384
    $region13: #{tpu_custom_call.1} parent=1 // pred_fallthru
      _
    // Predicated region
    $region14: #{tpu_custom_call.1} parent=1 // pred_check
      _
    $region15: #{tpu_custom_call.1} parent=1 // pred_check_branch
      %36 = sbr.rel (0) target = $region17
    $region16: #{tpu_custom_call.1} parent=1 // pred_region
      %37 = dma.done [#allocation8], 128
    $region17: #{tpu_custom_call.1} parent=1 // pred_fallthru
      _
    %p38 = scmp.eq.s32.totalorder 0, 0
    // Predicated region
    $region18: #{tpu_custom_call.1} parent=1 // pred_check
      %p39 = pneg %p38
    $region19: #{tpu_custom_call.1} parent=1 // pred_check_branch
      %41 = sbr.rel (%p39) target = $region21
    $region20: #{tpu_custom_call.1} parent=1 // pred_region
      %42 = vst [vmem:[#allocation2] sm:$0x1] 0.0
      %43 = vst [vmem:[#allocation2 + $0x1] sm:$0x1] 0.0
      %44 = vst [vmem:[#allocation2 + $0x2] sm:$0x1] 0.0
      %45 = vst [vmem:[#allocation2 + $0x3] sm:$0x1] 0.0
      %46 = vst [vmem:[#allocation2 + $0x4] sm:$0x1] 0.0
      %47 = vst [vmem:[#allocation2 + $0x5] sm:$0x1] 0.0
      %48 = vst [vmem:[#allocation2 + $0x6] sm:$0x1] 0.0
      %49 = vst [vmem:[#allocation2 + $0x7] sm:$0x1] 0.0
      %vm50 = vcmask 7168
      %51 = vst.msk [vmem:[#allocation3] sm:$0xff] %vm50, 0.0
    $region21: #{tpu_custom_call.1} parent=1 // pred_fallthru
      _
    %v52 = vld [vmem:[#allocation4] sm:$0xff]
    %v53 = vld [vmem:[#allocation4 + $0x8] sm:$0xff]
    %v54 = vld [vmem:[#allocation4 + $0x10] sm:$0xff]
    %v55 = vld [vmem:[#allocation4 + $0x18] sm:$0xff]
    %v56 = vld [vmem:[#allocation4 + $0x20] sm:$0xff]
    %v57 = vld [vmem:[#allocation4 + $0x28] sm:$0xff]
    %v58 = vld [vmem:[#allocation4 + $0x30] sm:$0xff]
    %v59 = vld [vmem:[#allocation4 + $0x38] sm:$0xff]
    %v60 = vld [vmem:[#allocation4 + $0x40] sm:$0xff]
    %v61 = vld [vmem:[#allocation4 + $0x48] sm:$0xff]
    %v62 = vld [vmem:[#allocation4 + $0x50] sm:$0xff]
    %v63 = vld [vmem:[#allocation4 + $0x58] sm:$0xff]
    %v64 = vld [vmem:[#allocation4 + $0x60] sm:$0xff]
    %v65 = vld [vmem:[#allocation4 + $0x68] sm:$0xff]
    %v66 = vld [vmem:[#allocation4 + $0x70] sm:$0xff]
    %v67 = vld [vmem:[#allocation4 + $0x78] sm:$0xff]
    %v68 = vld [vmem:[#allocation4 + $0x80] sm:$0xff]
    %v69 = vld [vmem:[#allocation4 + $0x88] sm:$0xff]
    %v70 = vld [vmem:[#allocation4 + $0x90] sm:$0xff]
    %v71 = vld [vmem:[#allocation4 + $0x98] sm:$0xff]
    %v72 = vld [vmem:[#allocation4 + $0xa0] sm:$0xff]
    %v73 = vld [vmem:[#allocation4 + $0xa8] sm:$0xff]
    %v74 = vld [vmem:[#allocation4 + $0xb0] sm:$0xff]
    %v75 = vld [vmem:[#allocation4 + $0xb8] sm:$0xff]
    %v76 = vld [vmem:[#allocation4 + $0xc0] sm:$0xff]
    %v77 = vld [vmem:[#allocation4 + $0xc8] sm:$0xff]
    %v78 = vld [vmem:[#allocation4 + $0xd0] sm:$0xff]
    %v79 = vld [vmem:[#allocation4 + $0xd8] sm:$0xff]
    %v80 = vld [vmem:[#allocation4 + $0xe0] sm:$0xff]
    %v81 = vld [vmem:[#allocation4 + $0xe8] sm:$0xff]
    %v82 = vld [vmem:[#allocation4 + $0xf0] sm:$0xff]
    %v83 = vld [vmem:[#allocation4 + $0xf8] sm:$0xff]
    %v84 = vld [vmem:[#allocation4 + $0x100] sm:$0xff]
    %v85 = vld [vmem:[#allocation4 + $0x108] sm:$0xff]
    %v86 = vld [vmem:[#allocation4 + $0x110] sm:$0xff]
    %v87 = vld [vmem:[#allocation4 + $0x118] sm:$0xff]
    %v88 = vld [vmem:[#allocation4 + $0x120] sm:$0xff]
    %v89 = vld [vmem:[#allocation4 + $0x128] sm:$0xff]
    %v90 = vld [vmem:[#allocation4 + $0x130] sm:$0xff]
    %v91 = vld [vmem:[#allocation4 + $0x138] sm:$0xff]
    %v92 = vld [vmem:[#allocation4 + $0x140] sm:$0xff]
    %v93 = vld [vmem:[#allocation4 + $0x148] sm:$0xff]
    %v94 = vld [vmem:[#allocation4 + $0x150] sm:$0xff]
    %v95 = vld [vmem:[#allocation4 + $0x158] sm:$0xff]
    %v96 = vld [vmem:[#allocation4 + $0x160] sm:$0xff]
    %v97 = vld [vmem:[#allocation4 + $0x168] sm:$0xff]
    %v98 = vld [vmem:[#allocation4 + $0x170] sm:$0xff]
    %v99 = vld [vmem:[#allocation4 + $0x178] sm:$0xff]
    %v100 = vld [vmem:[#allocation4 + $0x180] sm:$0xff]
    %v101 = vld [vmem:[#allocation4 + $0x188] sm:$0xff]
    %v102 = vld [vmem:[#allocation4 + $0x190] sm:$0xff]
    %v103 = vld [vmem:[#allocation4 + $0x198] sm:$0xff]
    %v104 = vld [vmem:[#allocation4 + $0x1a0] sm:$0xff]
    %v105 = vld [vmem:[#allocation4 + $0x1a8] sm:$0xff]
    %v106 = vld [vmem:[#allocation4 + $0x1b0] sm:$0xff]
    %v107 = vld [vmem:[#allocation4 + $0x1b8] sm:$0xff]
    %v108 = vld [vmem:[#allocation4 + $0x1c0] sm:$0xff]
    %v109 = vld [vmem:[#allocation4 + $0x1c8] sm:$0xff]
    %v110 = vld [vmem:[#allocation4 + $0x1d0] sm:$0xff]
    %v111 = vld [vmem:[#allocation4 + $0x1d8] sm:$0xff]
    %v112 = vld [vmem:[#allocation4 + $0x1e0] sm:$0xff]
    %v113 = vld [vmem:[#allocation4 + $0x1e8] sm:$0xff]
    %v114 = vld [vmem:[#allocation4 + $0x1f0] sm:$0xff]
    %v115 = vld [vmem:[#allocation4 + $0x1f8] sm:$0xff]
    %v116 = vld [vmem:[#allocation4 + $0x200] sm:$0xff]
    %v117 = vld [vmem:[#allocation4 + $0x208] sm:$0xff]
    %v118 = vld [vmem:[#allocation4 + $0x210] sm:$0xff]
    %v119 = vld [vmem:[#allocation4 + $0x218] sm:$0xff]
    %v120 = vld [vmem:[#allocation4 + $0x220] sm:$0xff]
    %v121 = vld [vmem:[#allocation4 + $0x228] sm:$0xff]
    %v122 = vld [vmem:[#allocation4 + $0x230] sm:$0xff]
    %v123 = vld [vmem:[#allocation4 + $0x238] sm:$0xff]
    %v124 = vld [vmem:[#allocation4 + $0x240] sm:$0xff]
    %v125 = vld [vmem:[#allocation4 + $0x248] sm:$0xff]
    %v126 = vld [vmem:[#allocation4 + $0x250] sm:$0xff]
    %v127 = vld [vmem:[#allocation4 + $0x258] sm:$0xff]
    %v128 = vld [vmem:[#allocation4 + $0x260] sm:$0xff]
    %v129 = vld [vmem:[#allocation4 + $0x268] sm:$0xff]
    %v130 = vld [vmem:[#allocation4 + $0x270] sm:$0xff]
    %v131 = vld [vmem:[#allocation4 + $0x278] sm:$0xff]
    %v132 = vld [vmem:[#allocation4 + $0x280] sm:$0xff]
    %v133 = vld [vmem:[#allocation4 + $0x288] sm:$0xff]
    %v134 = vld [vmem:[#allocation4 + $0x290] sm:$0xff]
    %v135 = vld [vmem:[#allocation4 + $0x298] sm:$0xff]
    %v136 = vld [vmem:[#allocation4 + $0x2a0] sm:$0xff]
    %v137 = vld [vmem:[#allocation4 + $0x2a8] sm:$0xff]
    %v138 = vld [vmem:[#allocation4 + $0x2b0] sm:$0xff]
    %v139 = vld [vmem:[#allocation4 + $0x2b8] sm:$0xff]
    %v140 = vld [vmem:[#allocation4 + $0x2c0] sm:$0xff]
    %v141 = vld [vmem:[#allocation4 + $0x2c8] sm:$0xff]
    %v142 = vld [vmem:[#allocation4 + $0x2d0] sm:$0xff]
    %v143 = vld [vmem:[#allocation4 + $0x2d8] sm:$0xff]
    %v144 = vld [vmem:[#allocation4 + $0x2e0] sm:$0xff]
    %v145 = vld [vmem:[#allocation4 + $0x2e8] sm:$0xff]
    %v146 = vld [vmem:[#allocation4 + $0x2f0] sm:$0xff]
    %v147 = vld [vmem:[#allocation4 + $0x2f8] sm:$0xff]
    %v148 = vld [vmem:[#allocation4 + $0x300] sm:$0xff]
    %v149 = vld [vmem:[#allocation4 + $0x308] sm:$0xff]
    %v150 = vld [vmem:[#allocation4 + $0x310] sm:$0xff]
    %v151 = vld [vmem:[#allocation4 + $0x318] sm:$0xff]
    %v152 = vld [vmem:[#allocation4 + $0x320] sm:$0xff]
    %v153 = vld [vmem:[#allocation4 + $0x328] sm:$0xff]
    %v154 = vld [vmem:[#allocation4 + $0x330] sm:$0xff]
    %v155 = vld [vmem:[#allocation4 + $0x338] sm:$0xff]
    %v156 = vld [vmem:[#allocation4 + $0x340] sm:$0xff]
    %v157 = vld [vmem:[#allocation4 + $0x348] sm:$0xff]
    %v158 = vld [vmem:[#allocation4 + $0x350] sm:$0xff]
    %v159 = vld [vmem:[#allocation4 + $0x358] sm:$0xff]
    %v160 = vld [vmem:[#allocation4 + $0x360] sm:$0xff]
    %v161 = vld [vmem:[#allocation4 + $0x368] sm:$0xff]
    %v162 = vld [vmem:[#allocation4 + $0x370] sm:$0xff]
    %v163 = vld [vmem:[#allocation4 + $0x378] sm:$0xff]
    %v164 = vld [vmem:[#allocation4 + $0x380] sm:$0xff]
    %v165 = vld [vmem:[#allocation4 + $0x388] sm:$0xff]
    %v166 = vld [vmem:[#allocation4 + $0x390] sm:$0xff]
    %v167 = vld [vmem:[#allocation4 + $0x398] sm:$0xff]
    %v168 = vld [vmem:[#allocation4 + $0x3a0] sm:$0xff]
    %v169 = vld [vmem:[#allocation4 + $0x3a8] sm:$0xff]
    %v170 = vld [vmem:[#allocation4 + $0x3b0] sm:$0xff]
    %v171 = vld [vmem:[#allocation4 + $0x3b8] sm:$0xff]
    %v172 = vld [vmem:[#allocation4 + $0x3c0] sm:$0xff]
    %v173 = vld [vmem:[#allocation4 + $0x3c8] sm:$0xff]
    %v174 = vld [vmem:[#allocation4 + $0x3d0] sm:$0xff]
    %v175 = vld [vmem:[#allocation4 + $0x3d8] sm:$0xff]
    %v176 = vld [vmem:[#allocation4 + $0x3e0] sm:$0xff]
    %v177 = vld [vmem:[#allocation4 + $0x3e8] sm:$0xff]
    %v178 = vld [vmem:[#allocation4 + $0x3f0] sm:$0xff]
    %v179 = vld [vmem:[#allocation4 + $0x3f8] sm:$0xff]
    %v180 = vld [vmem:[#allocation7] sm:$0xff]
    %v182 = vcombine.high %v180, %v180
    %v184 = vunpack.c.l.s4 1966171168
    %v185 = vunpack.c.0.s8 %v184
    %v186 = vlaneseq
    %v187 = vshrl.u32 %v186, 7
    %v188 = vsub.s32 %v185, %v187
    %v189 = vrot.slane %v180, %v188
    %v191 = vunpack.c.l.s4 1966171168
    %v192 = vunpack.c.0.s8 %v191
    %v193 = vlaneseq
    %v194 = vshrl.u32 %v193, 7
    %v195 = vsub.s32 %v192, %v194
    %v196 = vrot.slane %v182, %v195
    %v197 = vcombine.high %v189, %v189
    %v198 = vcombine.high %v196, %v196
    %v200 = vunpack.c.l.s4 1966171168
    %v201 = vunpack.c.0.s8 %v200
    %v202 = vlaneseq
    %v203 = vshrl.u32 %v202, 7
    %v204 = vsub.s32 %v201, %v203
    %v205 = vrot.slane %v189, %v204
    %v207 = vunpack.c.l.s4 1966171168
    %v208 = vunpack.c.0.s8 %v207
    %v209 = vlaneseq
    %v210 = vshrl.u32 %v209, 7
    %v211 = vsub.s32 %v208, %v210
    %v212 = vrot.slane %v196, %v211
    %v214 = vunpack.c.l.s4 1966171168
    %v215 = vunpack.c.0.s8 %v214
    %v216 = vlaneseq
    %v217 = vshrl.u32 %v216, 7
    %v218 = vsub.s32 %v215, %v217
    %v219 = vrot.slane %v197, %v218
    %v221 = vunpack.c.l.s4 1966171168
    %v222 = vunpack.c.0.s8 %v221
    %v223 = vlaneseq
    %v224 = vshrl.u32 %v223, 7
    %v225 = vsub.s32 %v222, %v224
    %v226 = vrot.slane %v198, %v225
    %v227 = vcombine.high %v205, %v205
    %v228 = vcombine.high %v212, %v212
    %v229 = vcombine.high %v219, %v219
    %v230 = vcombine.high %v226, %v226
    %v239 = vld [vmem:[#allocation2] sm:$0x1]
    %v240 = vld [vmem:[#allocation2 + $0x1] sm:$0x1]
    %v241 = vld [vmem:[#allocation2 + $0x2] sm:$0x1]
    %v242 = vld [vmem:[#allocation2 + $0x3] sm:$0x1]
    %v243 = vld [vmem:[#allocation2 + $0x4] sm:$0x1]
    %v244 = vld [vmem:[#allocation2 + $0x5] sm:$0x1]
    %v245 = vld [vmem:[#allocation2 + $0x6] sm:$0x1]
    %v246 = vld [vmem:[#allocation2 + $0x7] sm:$0x1]
    %247 = vmatprep.subr.mxu0 0.0
    %248 = vmatpush1.msra.mxu0 %v52
    %249 = vmatprep.subr.mxu0 0.0
    %250 = vmatpush1.msra.mxu0 %v53
    %251 = vmatprep.subr.mxu0 0.0
    %252 = vmatpush1.msra.mxu0 %v54
    %253 = vmatprep.subr.mxu0 0.0
    %254 = vmatpush1.msra.mxu0 %v55
    %255 = vmatprep.subr.mxu0 0.0
    %256 = vmatpush1.msra.mxu0 %v56
    %257 = vmatprep.subr.mxu0 0.0
    %258 = vmatpush1.msra.mxu0 %v57
    %259 = vmatprep.subr.mxu0 0.0
    %260 = vmatpush1.msra.mxu0 %v58
    %261 = vmatprep.subr.mxu0 0.0
    %262 = vmatpush1.msra.mxu0 %v59
    %263 = vmatprep.subr.mxu0 0.0
    %264 = vmatpush1.msra.mxu0 %v60
    %265 = vmatprep.subr.mxu0 0.0
    %266 = vmatpush1.msra.mxu0 %v61
    %267 = vmatprep.subr.mxu0 0.0
    %268 = vmatpush1.msra.mxu0 %v62
    %269 = vmatprep.subr.mxu0 0.0
    %270 = vmatpush1.msra.mxu0 %v63
    %271 = vmatprep.subr.mxu0 0.0
    %272 = vmatpush1.msra.mxu0 %v64
    %273 = vmatprep.subr.mxu0 0.0
    %274 = vmatpush1.msra.mxu0 %v65
    %275 = vmatprep.subr.mxu0 0.0
    %276 = vmatpush1.msra.mxu0 %v66
    %277 = vmatprep.subr.mxu0 0.0
    %278 = vmatpush1.msra.mxu0 %v67
    %279 = vmatprep.subr.mxu0 0.0
    %280 = vmatpush1.msra.mxu0 0.0
    %281 = vmatprep.subr.mxu0 0.0
    %282 = vmatpush1.msra.mxu0 0.0
    %283 = vmatprep.subr.mxu0 0.0
    %284 = vmatpush1.msra.mxu0 0.0
    %285 = vmatprep.subr.mxu0 0.0
    %286 = vmatpush1.msra.mxu0 0.0
    %287 = vmatprep.subr.mxu0 0.0
    %288 = vmatpush1.msra.mxu0 0.0
    %289 = vmatprep.subr.mxu0 0.0
    %290 = vmatpush1.msra.mxu0 0.0
    %291 = vmatprep.subr.mxu0 0.0
    %292 = vmatpush1.msra.mxu0 0.0
    %293 = vmatprep.subr.mxu0 0.0
    %294 = vmatpush1.msra.mxu0 0.0
    %295 = vmatprep.subr.mxu0 0.0
    %296 = vmatpush1.msra.mxu0 0.0
    %297 = vmatprep.subr.mxu0 0.0
    %298 = vmatpush1.msra.mxu0 0.0
    %299 = vmatprep.subr.mxu0 0.0
    %300 = vmatpush1.msra.mxu0 0.0
    %301 = vmatprep.subr.mxu0 0.0
    %302 = vmatpush1.msra.mxu0 0.0
    %303 = vmatprep.subr.mxu0 0.0
    %304 = vmatpush1.msra.mxu0 0.0
    %305 = vmatprep.subr.mxu0 0.0
    %306 = vmatpush1.msra.mxu0 0.0
    %307 = vmatprep.subr.mxu0 0.0
    %308 = vmatpush1.msra.mxu0 0.0
    %309 = vmatprep.subr.mxu0 0.0
    %310 = vmatpush1.msra.mxu0 0.0
    %311 = vmatprep.mubr.f32.mxu0 0.0
    %312 = vmatmul.mubr.f32.gmra.mrb[0].mxu0 %v205
    %v313 = vpop.f32.mrb[0].mxu0
    %v314 = vadd.f32 0.0, %v313
    %v315 = vpop.f32.mrb[0].mxu0
    %316 = vdwg.mxu0
    %317 = vmatprep.subr.mxu0 0.0
    %318 = vmatpush1.msra.mxu0 %v68
    %319 = vmatprep.subr.mxu0 0.0
    %320 = vmatpush1.msra.mxu0 %v69
    %321 = vmatprep.subr.mxu0 0.0
    %322 = vmatpush1.msra.mxu0 %v70
    %323 = vmatprep.subr.mxu0 0.0
    %324 = vmatpush1.msra.mxu0 %v71
    %325 = vmatprep.subr.mxu0 0.0
    %326 = vmatpush1.msra.mxu0 %v72
    %327 = vmatprep.subr.mxu0 0.0
    %328 = vmatpush1.msra.mxu0 %v73
    %329 = vmatprep.subr.mxu0 0.0
    %330 = vmatpush1.msra.mxu0 %v74
    %331 = vmatprep.subr.mxu0 0.0
    %332 = vmatpush1.msra.mxu0 %v75
    %333 = vmatprep.subr.mxu0 0.0
    %334 = vmatpush1.msra.mxu0 %v76
    %335 = vmatprep.subr.mxu0 0.0
    %336 = vmatpush1.msra.mxu0 %v77
    %337 = vmatprep.subr.mxu0 0.0
    %338 = vmatpush1.msra.mxu0 %v78
    %339 = vmatprep.subr.mxu0 0.0
    %340 = vmatpush1.msra.mxu0 %v79
    %341 = vmatprep.subr.mxu0 0.0
    %342 = vmatpush1.msra.mxu0 %v80
    %343 = vmatprep.subr.mxu0 0.0
    %344 = vmatpush1.msra.mxu0 %v81
    %345 = vmatprep.subr.mxu0 0.0
    %346 = vmatpush1.msra.mxu0 %v82
    %347 = vmatprep.subr.mxu0 0.0
    %348 = vmatpush1.msra.mxu0 %v83
    %349 = vmatprep.subr.mxu0 0.0
    %350 = vmatpush1.msra.mxu0 0.0
    %351 = vmatprep.subr.mxu0 0.0
    %352 = vmatpush1.msra.mxu0 0.0
    %353 = vmatprep.subr.mxu0 0.0
    %354 = vmatpush1.msra.mxu0 0.0
    %355 = vmatprep.subr.mxu0 0.0
    %356 = vmatpush1.msra.mxu0 0.0
    %357 = vmatprep.subr.mxu0 0.0
    %358 = vmatpush1.msra.mxu0 0.0
    %359 = vmatprep.subr.mxu0 0.0
    %360 = vmatpush1.msra.mxu0 0.0
    %361 = vmatprep.subr.mxu0 0.0
    %362 = vmatpush1.msra.mxu0 0.0
    %363 = vmatprep.subr.mxu0 0.0
    %364 = vmatpush1.msra.mxu0 0.0
    %365 = vmatprep.subr.mxu0 0.0
    %366 = vmatpush1.msra.mxu0 0.0
    %367 = vmatprep.subr.mxu0 0.0
    %368 = vmatpush1.msra.mxu0 0.0
    %369 = vmatprep.subr.mxu0 0.0
    %370 = vmatpush1.msra.mxu0 0.0
    %371 = vmatprep.subr.mxu0 0.0
    %372 = vmatpush1.msra.mxu0 0.0
    %373 = vmatprep.subr.mxu0 0.0
    %374 = vmatpush1.msra.mxu0 0.0
    %375 = vmatprep.subr.mxu0 0.0
    %376 = vmatpush1.msra.mxu0 0.0
    %377 = vmatprep.subr.mxu0 0.0
    %378 = vmatpush1.msra.mxu0 0.0
    %379 = vmatprep.subr.mxu0 0.0
    %380 = vmatpush1.msra.mxu0 0.0
    %381 = vmatprep.mubr.f32.mxu0 0.0
    %382 = vmatmul.mubr.f32.gmra.mrb[0].mxu0 %v219
    %v383 = vpop.f32.mrb[0].mxu0
    %v384 = vadd.f32 0.0, %v383
    %v385 = vpop.f32.mrb[0].mxu0
    %386 = vdwg.mxu0
    %387 = vmatprep.subr.mxu0 0.0
    %388 = vmatpush1.msra.mxu0 %v84
    %389 = vmatprep.subr.mxu0 0.0
    %390 = vmatpush1.msra.mxu0 %v85
    %391 = vmatprep.subr.mxu0 0.0
    %392 = vmatpush1.msra.mxu0 %v86
    %393 = vmatprep.subr.mxu0 0.0
    %394 = vmatpush1.msra.mxu0 %v87
    %395 = vmatprep.subr.mxu0 0.0
    %396 = vmatpush1.msra.mxu0 %v88
    %397 = vmatprep.subr.mxu0 0.0
    %398 = vmatpush1.msra.mxu0 %v89
    %399 = vmatprep.subr.mxu0 0.0
    %400 = vmatpush1.msra.mxu0 %v90
    %401 = vmatprep.subr.mxu0 0.0
    %402 = vmatpush1.msra.mxu0 %v91
    %403 = vmatprep.subr.mxu0 0.0
    %404 = vmatpush1.msra.mxu0 %v92
    %405 = vmatprep.subr.mxu0 0.0
    %406 = vmatpush1.msra.mxu0 %v93
    %407 = vmatprep.subr.mxu0 0.0
    %408 = vmatpush1.msra.mxu0 %v94
    %409 = vmatprep.subr.mxu0 0.0
    %410 = vmatpush1.msra.mxu0 %v95
    %411 = vmatprep.subr.mxu0 0.0
    %412 = vmatpush1.msra.mxu0 %v96
    %413 = vmatprep.subr.mxu0 0.0
    %414 = vmatpush1.msra.mxu0 %v97
    %415 = vmatprep.subr.mxu0 0.0
    %416 = vmatpush1.msra.mxu0 %v98
    %417 = vmatprep.subr.mxu0 0.0
    %418 = vmatpush1.msra.mxu0 %v99
    %419 = vmatprep.subr.mxu0 0.0
    %420 = vmatpush1.msra.mxu0 0.0
    %421 = vmatprep.subr.mxu0 0.0
    %422 = vmatpush1.msra.mxu0 0.0
    %423 = vmatprep.subr.mxu0 0.0
    %424 = vmatpush1.msra.mxu0 0.0
    %425 = vmatprep.subr.mxu0 0.0
    %426 = vmatpush1.msra.mxu0 0.0
    %427 = vmatprep.subr.mxu0 0.0
    %428 = vmatpush1.msra.mxu0 0.0
    %429 = vmatprep.subr.mxu0 0.0
    %430 = vmatpush1.msra.mxu0 0.0
    %431 = vmatprep.subr.mxu0 0.0
    %432 = vmatpush1.msra.mxu0 0.0
    %433 = vmatprep.subr.mxu0 0.0
    %434 = vmatpush1.msra.mxu0 0.0
    %435 = vmatprep.subr.mxu0 0.0
    %436 = vmatpush1.msra.mxu0 0.0
    %437 = vmatprep.subr.mxu0 0.0
    %438 = vmatpush1.msra.mxu0 0.0
    %439 = vmatprep.subr.mxu0 0.0
    %440 = vmatpush1.msra.mxu0 0.0
    %441 = vmatprep.subr.mxu0 0.0
    %442 = vmatpush1.msra.mxu0 0.0
    %443 = vmatprep.subr.mxu0 0.0
    %444 = vmatpush1.msra.mxu0 0.0
    %445 = vmatprep.subr.mxu0 0.0
    %446 = vmatpush1.msra.mxu0 0.0
    %447 = vmatprep.subr.mxu0 0.0
    %448 = vmatpush1.msra.mxu0 0.0
    %449 = vmatprep.subr.mxu0 0.0
    %450 = vmatpush1.msra.mxu0 0.0
    %451 = vmatprep.mubr.f32.mxu0 0.0
    %452 = vmatmul.mubr.f32.gmra.mrb[0].mxu0 %v227
    %v453 = vpop.f32.mrb[0].mxu0
    %v454 = vadd.f32 0.0, %v453
    %v455 = vpop.f32.mrb[0].mxu0
    %456 = vdwg.mxu0
    %457 = vmatprep.subr.mxu0 0.0
    %458 = vmatpush1.msra.mxu0 %v100
    %459 = vmatprep.subr.mxu0 0.0
    %460 = vmatpush1.msra.mxu0 %v101
    %461 = vmatprep.subr.mxu0 0.0
    %462 = vmatpush1.msra.mxu0 %v102
    %463 = vmatprep.subr.mxu0 0.0
    %464 = vmatpush1.msra.mxu0 %v103
    %465 = vmatprep.subr.mxu0 0.0
    %466 = vmatpush1.msra.mxu0 %v104
    %467 = vmatprep.subr.mxu0 0.0
    %468 = vmatpush1.msra.mxu0 %v105
    %469 = vmatprep.subr.mxu0 0.0
    %470 = vmatpush1.msra.mxu0 %v106
    %471 = vmatprep.subr.mxu0 0.0
    %472 = vmatpush1.msra.mxu0 %v107
    %473 = vmatprep.subr.mxu0 0.0
    %474 = vmatpush1.msra.mxu0 %v108
    %475 = vmatprep.subr.mxu0 0.0
    %476 = vmatpush1.msra.mxu0 %v109
    %477 = vmatprep.subr.mxu0 0.0
    %478 = vmatpush1.msra.mxu0 %v110
    %479 = vmatprep.subr.mxu0 0.0
    %480 = vmatpush1.msra.mxu0 %v111
    %481 = vmatprep.subr.mxu0 0.0
    %482 = vmatpush1.msra.mxu0 %v112
    %483 = vmatprep.subr.mxu0 0.0
    %484 = vmatpush1.msra.mxu0 %v113
    %485 = vmatprep.subr.mxu0 0.0
    %486 = vmatpush1.msra.mxu0 %v114
    %487 = vmatprep.subr.mxu0 0.0
    %488 = vmatpush1.msra.mxu0 %v115
    %489 = vmatprep.subr.mxu0 0.0
    %490 = vmatpush1.msra.mxu0 0.0
    %491 = vmatprep.subr.mxu0 0.0
    %492 = vmatpush1.msra.mxu0 0.0
    %493 = vmatprep.subr.mxu0 0.0
    %494 = vmatpush1.msra.mxu0 0.0
    %495 = vmatprep.subr.mxu0 0.0
    %496 = vmatpush1.msra.mxu0 0.0
    %497 = vmatprep.subr.mxu0 0.0
    %498 = vmatpush1.msra.mxu0 0.0
    %499 = vmatprep.subr.mxu0 0.0
    %500 = vmatpush1.msra.mxu0 0.0
    %501 = vmatprep.subr.mxu0 0.0
    %502 = vmatpush1.msra.mxu0 0.0
    %503 = vmatprep.subr.mxu0 0.0
    %504 = vmatpush1.msra.mxu0 0.0
    %505 = vmatprep.subr.mxu0 0.0
    %506 = vmatpush1.msra.mxu0 0.0
    %507 = vmatprep.subr.mxu0 0.0
    %508 = vmatpush1.msra.mxu0 0.0
    %509 = vmatprep.subr.mxu0 0.0
    %510 = vmatpush1.msra.mxu0 0.0
    %511 = vmatprep.subr.mxu0 0.0
    %512 = vmatpush1.msra.mxu0 0.0
    %513 = vmatprep.subr.mxu0 0.0
    %514 = vmatpush1.msra.mxu0 0.0
    %515 = vmatprep.subr.mxu0 0.0
    %516 = vmatpush1.msra.mxu0 0.0
    %517 = vmatprep.subr.mxu0 0.0
    %518 = vmatpush1.msra.mxu0 0.0
    %519 = vmatprep.subr.mxu0 0.0
    %520 = vmatpush1.msra.mxu0 0.0
    %521 = vmatprep.mubr.f32.mxu0 0.0
    %522 = vmatmul.mubr.f32.gmra.mrb[0].mxu0 %v229
    %v523 = vpop.f32.mrb[0].mxu0
    %v524 = vadd.f32 0.0, %v523
    %v525 = vpop.f32.mrb[0].mxu0
    %526 = vdwg.mxu0
    %527 = vmatprep.subr.mxu0 0.0
    %528 = vmatpush1.msra.mxu0 %v116
    %529 = vmatprep.subr.mxu0 0.0
    %530 = vmatpush1.msra.mxu0 %v117
    %531 = vmatprep.subr.mxu0 0.0
    %532 = vmatpush1.msra.mxu0 %v118
    %533 = vmatprep.subr.mxu0 0.0
    %534 = vmatpush1.msra.mxu0 %v119
    %535 = vmatprep.subr.mxu0 0.0
    %536 = vmatpush1.msra.mxu0 %v120
    %537 = vmatprep.subr.mxu0 0.0
    %538 = vmatpush1.msra.mxu0 %v121
    %539 = vmatprep.subr.mxu0 0.0
    %540 = vmatpush1.msra.mxu0 %v122
    %541 = vmatprep.subr.mxu0 0.0
    %542 = vmatpush1.msra.mxu0 %v123
    %543 = vmatprep.subr.mxu0 0.0
    %544 = vmatpush1.msra.mxu0 %v124
    %545 = vmatprep.subr.mxu0 0.0
    %546 = vmatpush1.msra.mxu0 %v125
    %547 = vmatprep.subr.mxu0 0.0
    %548 = vmatpush1.msra.mxu0 %v126
    %549 = vmatprep.subr.mxu0 0.0
    %550 = vmatpush1.msra.mxu0 %v127
    %551 = vmatprep.subr.mxu0 0.0
    %552 = vmatpush1.msra.mxu0 %v128
    %553 = vmatprep.subr.mxu0 0.0
    %554 = vmatpush1.msra.mxu0 %v129
    %555 = vmatprep.subr.mxu0 0.0
    %556 = vmatpush1.msra.mxu0 %v130
    %557 = vmatprep.subr.mxu0 0.0
    %558 = vmatpush1.msra.mxu0 %v131
    %559 = vmatprep.subr.mxu0 0.0
    %560 = vmatpush1.msra.mxu0 0.0
    %561 = vmatprep.subr.mxu0 0.0
    %562 = vmatpush1.msra.mxu0 0.0
    %563 = vmatprep.subr.mxu0 0.0
    %564 = vmatpush1.msra.mxu0 0.0
    %565 = vmatprep.subr.mxu0 0.0
    %566 = vmatpush1.msra.mxu0 0.0
    %567 = vmatprep.subr.mxu0 0.0
    %568 = vmatpush1.msra.mxu0 0.0
    %569 = vmatprep.subr.mxu0 0.0
    %570 = vmatpush1.msra.mxu0 0.0
    %571 = vmatprep.subr.mxu0 0.0
    %572 = vmatpush1.msra.mxu0 0.0
    %573 = vmatprep.subr.mxu0 0.0
    %574 = vmatpush1.msra.mxu0 0.0
    %575 = vmatprep.subr.mxu0 0.0
    %576 = vmatpush1.msra.mxu0 0.0
    %577 = vmatprep.subr.mxu0 0.0
    %578 = vmatpush1.msra.mxu0 0.0
    %579 = vmatprep.subr.mxu0 0.0
    %580 = vmatpush1.msra.mxu0 0.0
    %581 = vmatprep.subr.mxu0 0.0
    %582 = vmatpush1.msra.mxu0 0.0
    %583 = vmatprep.subr.mxu0 0.0
    %584 = vmatpush1.msra.mxu0 0.0
    %585 = vmatprep.subr.mxu0 0.0
    %586 = vmatpush1.msra.mxu0 0.0
    %587 = vmatprep.subr.mxu0 0.0
    %588 = vmatpush1.msra.mxu0 0.0
    %589 = vmatprep.subr.mxu0 0.0
    %590 = vmatpush1.msra.mxu0 0.0
    %591 = vmatprep.mubr.f32.mxu0 0.0
    %592 = vmatmul.mubr.f32.gmra.mrb[0].mxu0 %v212
    %v593 = vpop.f32.mrb[0].mxu0
    %v594 = vadd.f32 0.0, %v593
    %v595 = vpop.f32.mrb[0].mxu0
    %596 = vdwg.mxu0
    %597 = vmatprep.subr.mxu0 0.0
    %598 = vmatpush1.msra.mxu0 %v132
    %599 = vmatprep.subr.mxu0 0.0
    %600 = vmatpush1.msra.mxu0 %v133
    %601 = vmatprep.subr.mxu0 0.0
    %602 = vmatpush1.msra.mxu0 %v134
    %603 = vmatprep.subr.mxu0 0.0
    %604 = vmatpush1.msra.mxu0 %v135
    %605 = vmatprep.subr.mxu0 0.0
    %606 = vmatpush1.msra.mxu0 %v136
    %607 = vmatprep.subr.mxu0 0.0
    %608 = vmatpush1.msra.mxu0 %v137
    %609 = vmatprep.subr.mxu0 0.0
    %610 = vmatpush1.msra.mxu0 %v138
    %611 = vmatprep.subr.mxu0 0.0
    %612 = vmatpush1.msra.mxu0 %v139
    %613 = vmatprep.subr.mxu0 0.0
    %614 = vmatpush1.msra.mxu0 %v140
    %615 = vmatprep.subr.mxu0 0.0
    %616 = vmatpush1.msra.mxu0 %v141
    %617 = vmatprep.subr.mxu0 0.0
    %618 = vmatpush1.msra.mxu0 %v142
    %619 = vmatprep.subr.mxu0 0.0
    %620 = vmatpush1.msra.mxu0 %v143
    %621 = vmatprep.subr.mxu0 0.0
    %622 = vmatpush1.msra.mxu0 %v144
    %623 = vmatprep.subr.mxu0 0.0
    %624 = vmatpush1.msra.mxu0 %v145
    %625 = vmatprep.subr.mxu0 0.0
    %626 = vmatpush1.msra.mxu0 %v146
    %627 = vmatprep.subr.mxu0 0.0
    %628 = vmatpush1.msra.mxu0 %v147
    %629 = vmatprep.subr.mxu0 0.0
    %630 = vmatpush1.msra.mxu0 0.0
    %631 = vmatprep.subr.mxu0 0.0
    %632 = vmatpush1.msra.mxu0 0.0
    %633 = vmatprep.subr.mxu0 0.0
    %634 = vmatpush1.msra.mxu0 0.0
    %635 = vmatprep.subr.mxu0 0.0
    %636 = vmatpush1.msra.mxu0 0.0
    %637 = vmatprep.subr.mxu0 0.0
    %638 = vmatpush1.msra.mxu0 0.0
    %639 = vmatprep.subr.mxu0 0.0
    %640 = vmatpush1.msra.mxu0 0.0
    %641 = vmatprep.subr.mxu0 0.0
    %642 = vmatpush1.msra.mxu0 0.0
    %643 = vmatprep.subr.mxu0 0.0
    %644 = vmatpush1.msra.mxu0 0.0
    %645 = vmatprep.subr.mxu0 0.0
    %646 = vmatpush1.msra.mxu0 0.0
    %647 = vmatprep.subr.mxu0 0.0
    %648 = vmatpush1.msra.mxu0 0.0
    %649 = vmatprep.subr.mxu0 0.0
    %650 = vmatpush1.msra.mxu0 0.0
    %651 = vmatprep.subr.mxu0 0.0
    %652 = vmatpush1.msra.mxu0 0.0
    %653 = vmatprep.subr.mxu0 0.0
    %654 = vmatpush1.msra.mxu0 0.0
    %655 = vmatprep.subr.mxu0 0.0
    %656 = vmatpush1.msra.mxu0 0.0
    %657 = vmatprep.subr.mxu0 0.0
    %658 = vmatpush1.msra.mxu0 0.0
    %659 = vmatprep.subr.mxu0 0.0
    %660 = vmatpush1.msra.mxu0 0.0
    %661 = vmatprep.mubr.f32.mxu0 0.0
    %662 = vmatmul.mubr.f32.gmra.mrb[0].mxu0 %v226
    %v663 = vpop.f32.mrb[0].mxu0
    %v664 = vadd.f32 0.0, %v663
    %v665 = vpop.f32.mrb[0].mxu0
    %666 = vdwg.mxu0
    %667 = vmatprep.subr.mxu0 0.0
    %668 = vmatpush1.msra.mxu0 %v148
    %669 = vmatprep.subr.mxu0 0.0
    %670 = vmatpush1.msra.mxu0 %v149
    %671 = vmatprep.subr.mxu0 0.0
    %672 = vmatpush1.msra.mxu0 %v150
    %673 = vmatprep.subr.mxu0 0.0
    %674 = vmatpush1.msra.mxu0 %v151
    %675 = vmatprep.subr.mxu0 0.0
    %676 = vmatpush1.msra.mxu0 %v152
    %677 = vmatprep.subr.mxu0 0.0
    %678 = vmatpush1.msra.mxu0 %v153
    %679 = vmatprep.subr.mxu0 0.0
    %680 = vmatpush1.msra.mxu0 %v154
    %681 = vmatprep.subr.mxu0 0.0
    %682 = vmatpush1.msra.mxu0 %v155
    %683 = vmatprep.subr.mxu0 0.0
    %684 = vmatpush1.msra.mxu0 %v156
    %685 = vmatprep.subr.mxu0 0.0
    %686 = vmatpush1.msra.mxu0 %v157
    %687 = vmatprep.subr.mxu0 0.0
    %688 = vmatpush1.msra.mxu0 %v158
    %689 = vmatprep.subr.mxu0 0.0
    %690 = vmatpush1.msra.mxu0 %v159
    %691 = vmatprep.subr.mxu0 0.0
    %692 = vmatpush1.msra.mxu0 %v160
    %693 = vmatprep.subr.mxu0 0.0
    %694 = vmatpush1.msra.mxu0 %v161
    %695 = vmatprep.subr.mxu0 0.0
    %696 = vmatpush1.msra.mxu0 %v162
    %697 = vmatprep.subr.mxu0 0.0
    %698 = vmatpush1.msra.mxu0 %v163
    %699 = vmatprep.subr.mxu0 0.0
    %700 = vmatpush1.msra.mxu0 0.0
    %701 = vmatprep.subr.mxu0 0.0
    %702 = vmatpush1.msra.mxu0 0.0
    %703 = vmatprep.subr.mxu0 0.0
    %704 = vmatpush1.msra.mxu0 0.0
    %705 = vmatprep.subr.mxu0 0.0
    %706 = vmatpush1.msra.mxu0 0.0
    %707 = vmatprep.subr.mxu0 0.0
    %708 = vmatpush1.msra.mxu0 0.0
    %709 = vmatprep.subr.mxu0 0.0
    %710 = vmatpush1.msra.mxu0 0.0
    %711 = vmatprep.subr.mxu0 0.0
    %712 = vmatpush1.msra.mxu0 0.0
    %713 = vmatprep.subr.mxu0 0.0
    %714 = vmatpush1.msra.mxu0 0.0
    %715 = vmatprep.subr.mxu0 0.0
    %716 = vmatpush1.msra.mxu0 0.0
    %717 = vmatprep.subr.mxu0 0.0
    %718 = vmatpush1.msra.mxu0 0.0
    %719 = vmatprep.subr.mxu0 0.0
    %720 = vmatpush1.msra.mxu0 0.0
    %721 = vmatprep.subr.mxu0 0.0
    %722 = vmatpush1.msra.mxu0 0.0
    %723 = vmatprep.subr.mxu0 0.0
    %724 = vmatpush1.msra.mxu0 0.0
    %725 = vmatprep.subr.mxu0 0.0
    %726 = vmatpush1.msra.mxu0 0.0
    %727 = vmatprep.subr.mxu0 0.0
    %728 = vmatpush1.msra.mxu0 0.0
    %729 = vmatprep.subr.mxu0 0.0
    %730 = vmatpush1.msra.mxu0 0.0
    %731 = vmatprep.mubr.f32.mxu0 0.0
    %732 = vmatmul.mubr.f32.gmra.mrb[0].mxu0 %v228
    %v733 = vpop.f32.mrb[0].mxu0
    %v734 = vadd.f32 0.0, %v733
    %v735 = vpop.f32.mrb[0].mxu0
    %736 = vdwg.mxu0
    %737 = vmatprep.subr.mxu0 0.0
    %738 = vmatpush1.msra.mxu0 %v164
    %739 = vmatprep.subr.mxu0 0.0
    %740 = vmatpush1.msra.mxu0 %v165
    %741 = vmatprep.subr.mxu0 0.0
    %742 = vmatpush1.msra.mxu0 %v166
    %743 = vmatprep.subr.mxu0 0.0
    %744 = vmatpush1.msra.mxu0 %v167
    %745 = vmatprep.subr.mxu0 0.0
    %746 = vmatpush1.msra.mxu0 %v168
    %747 = vmatprep.subr.mxu0 0.0
    %748 = vmatpush1.msra.mxu0 %v169
    %749 = vmatprep.subr.mxu0 0.0
    %750 = vmatpush1.msra.mxu0 %v170
    %751 = vmatprep.subr.mxu0 0.0
    %752 = vmatpush1.msra.mxu0 %v171
    %753 = vmatprep.subr.mxu0 0.0
    %754 = vmatpush1.msra.mxu0 %v172
    %755 = vmatprep.subr.mxu0 0.0
    %756 = vmatpush1.msra.mxu0 %v173
    %757 = vmatprep.subr.mxu0 0.0
    %758 = vmatpush1.msra.mxu0 %v174
    %759 = vmatprep.subr.mxu0 0.0
    %760 = vmatpush1.msra.mxu0 %v175
    %761 = vmatprep.subr.mxu0 0.0
    %762 = vmatpush1.msra.mxu0 %v176
    %763 = vmatprep.subr.mxu0 0.0
    %764 = vmatpush1.msra.mxu0 %v177
    %765 = vmatprep.subr.mxu0 0.0
    %766 = vmatpush1.msra.mxu0 %v178
    %767 = vmatprep.subr.mxu0 0.0
    %768 = vmatpush1.msra.mxu0 %v179
    %769 = vmatprep.subr.mxu0 0.0
    %770 = vmatpush1.msra.mxu0 0.0
    %771 = vmatprep.subr.mxu0 0.0
    %772 = vmatpush1.msra.mxu0 0.0
    %773 = vmatprep.subr.mxu0 0.0
    %774 = vmatpush1.msra.mxu0 0.0
    %775 = vmatprep.subr.mxu0 0.0
    %776 = vmatpush1.msra.mxu0 0.0
    %777 = vmatprep.subr.mxu0 0.0
    %778 = vmatpush1.msra.mxu0 0.0
    %779 = vmatprep.subr.mxu0 0.0
    %780 = vmatpush1.msra.mxu0 0.0
    %781 = vmatprep.subr.mxu0 0.0
    %782 = vmatpush1.msra.mxu0 0.0
    %783 = vmatprep.subr.mxu0 0.0
    %784 = vmatpush1.msra.mxu0 0.0
    %785 = vmatprep.subr.mxu0 0.0
    %786 = vmatpush1.msra.mxu0 0.0
    %787 = vmatprep.subr.mxu0 0.0
    %788 = vmatpush1.msra.mxu0 0.0
    %789 = vmatprep.subr.mxu0 0.0
    %790 = vmatpush1.msra.mxu0 0.0
    %791 = vmatprep.subr.mxu0 0.0
    %792 = vmatpush1.msra.mxu0 0.0
    %793 = vmatprep.subr.mxu0 0.0
    %794 = vmatpush1.msra.mxu0 0.0
    %795 = vmatprep.subr.mxu0 0.0
    %796 = vmatpush1.msra.mxu0 0.0
    %797 = vmatprep.subr.mxu0 0.0
    %798 = vmatpush1.msra.mxu0 0.0
    %799 = vmatprep.subr.mxu0 0.0
    %800 = vmatpush1.msra.mxu0 0.0
    %801 = vmatprep.mubr.f32.mxu0 0.0
    %802 = vmatmul.mubr.f32.gmra.mrb[0].mxu0 %v230
    %v803 = vpop.f32.mrb[0].mxu0
    %v804 = vadd.f32 0.0, %v803
    %v805 = vpop.f32.mrb[0].mxu0
    %806 = vdwg.mxu0
    %v807 = vadd.f32 %v239, %v314
    %v808 = vadd.f32 %v240, %v384
    %v809 = vadd.f32 %v241, %v454
    %v810 = vadd.f32 %v242, %v524
    %v811 = vadd.f32 %v243, %v594
    %v812 = vadd.f32 %v244, %v664
    %v813 = vadd.f32 %v245, %v734
    %v814 = vadd.f32 %v246, %v804
    %815 = vst [vmem:[#allocation2] sm:$0x1] %v807
    %816 = vst [vmem:[#allocation2 + $0x1] sm:$0x1] %v808
    %817 = vst [vmem:[#allocation2 + $0x2] sm:$0x1] %v809
    %818 = vst [vmem:[#allocation2 + $0x3] sm:$0x1] %v810
    %819 = vst [vmem:[#allocation2 + $0x4] sm:$0x1] %v811
    %820 = vst [vmem:[#allocation2 + $0x5] sm:$0x1] %v812
    %821 = vst [vmem:[#allocation2 + $0x6] sm:$0x1] %v813
    %822 = vst [vmem:[#allocation2 + $0x7] sm:$0x1] %v814
    %v823 = vld [vmem:[#allocation3] sm:$0xff]
    %824 = vadd.xlane.f32.xlu0 %v180
    %v825 = vpop.xlane.xlu0 %824
    %v826 = vadd.f32 %v823, %v825
    %vm827 = vcmask 7168
    %828 = vst.msk [vmem:[#allocation3] sm:$0xff] %vm827, %v826
    // Predicated region
    $region22: #{tpu_custom_call.1} parent=1 // pred_check
      %p829 = pneg %p38
    $region23: #{tpu_custom_call.1} parent=1 // pred_check_branch
      %831 = sbr.rel (%p829) target = $region25
    $region24: #{tpu_custom_call.1} parent=1 // pred_region
      %v832 = vld [vmem:[#allocation2] sm:$0x1]
      %v833 = vld [vmem:[#allocation2 + $0x1] sm:$0x1]
      %v834 = vld [vmem:[#allocation2 + $0x2] sm:$0x1]
      %v835 = vld [vmem:[#allocation2 + $0x3] sm:$0x1]
      %v836 = vld [vmem:[#allocation2 + $0x4] sm:$0x1]
      %v837 = vld [vmem:[#allocation2 + $0x5] sm:$0x1]
      %v838 = vld [vmem:[#allocation2 + $0x6] sm:$0x1]
      %v839 = vld [vmem:[#allocation2 + $0x7] sm:$0x1]
      %v840 = vld [vmem:[#allocation3] sm:$0xff]
      %vm841 = vcmp.eq.f32.partialorder %v840, 0.0
      %843 = vset.pattern.permute.xlu0 0
      %844 = vperm.xlu0 %843, %v840
      %v845 = vpop.permute.xlu0 %844
      %v846 = vlaneseq
      %v847 = vshrl.u32 %v846, 7
      %v848 = vsub.s32 0, %v847
      %v849 = vrot.slane %v845, %v848
      %v850 = vlaneseq
      %v851 = vshrl.u32 %v850, 7
      %v852 = vsub.s32 1, %v851
      %v853 = vrot.slane %v845, %v852
      %v854 = vlaneseq
      %v855 = vshrl.u32 %v854, 7
      %v856 = vsub.s32 2, %v855
      %v857 = vrot.slane %v845, %v856
      %v858 = vlaneseq
      %v859 = vshrl.u32 %v858, 7
      %v860 = vsub.s32 3, %v859
      %v861 = vrot.slane %v845, %v860
      %v862 = vlaneseq
      %v863 = vshrl.u32 %v862, 7
      %v864 = vsub.s32 4, %v863
      %v865 = vrot.slane %v845, %v864
      %v866 = vlaneseq
      %v867 = vshrl.u32 %v866, 7
      %v868 = vsub.s32 5, %v867
      %v869 = vrot.slane %v845, %v868
      %v870 = vlaneseq
      %v871 = vshrl.u32 %v870, 7
      %v872 = vsub.s32 6, %v871
      %v873 = vrot.slane %v845, %v872
      %v874 = vlaneseq
      %v875 = vshrl.u32 %v874, 7
      %v876 = vsub.s32 7, %v875
      %v877 = vrot.slane %v845, %v876
      %v886 = vrcp.pop %v849
      %v887 = vmul.f32 %v832, %v886
      %v888 = vrcp.pop %v853
      %v889 = vmul.f32 %v833, %v888
      %v890 = vrcp.pop %v857
      %v891 = vmul.f32 %v834, %v890
      %v892 = vrcp.pop %v861
      %v893 = vmul.f32 %v835, %v892
      %v894 = vrcp.pop %v865
      %v895 = vmul.f32 %v836, %v894
      %v896 = vrcp.pop %v869
      %v897 = vmul.f32 %v837, %v896
      %v898 = vrcp.pop %v873
      %v899 = vmul.f32 %v838, %v898
      %v900 = vrcp.pop %v877
      %v901 = vmul.f32 %v839, %v900
      %v902 = vsel %vm841, 1, 0
      %903 = vset.pattern.permute.xlu0 0
      %904 = vperm.xlu0 %903, %v902
      %v905 = vpop.permute.xlu0 %904
      %vm906 = vcmp.eq.s32.totalorder %v905, 1
      %v915 = vcombine.low %v887, %v889
      %v916 = vcombine.low %v891, %v893
      %v917 = vcombine.low %v895, %v897
      %v918 = vcombine.low %v899, %v901
      %v920 = vunpack.c.l.s4 1966171168
      %v921 = vunpack.c.0.s8 %v920
      %v922 = vlaneseq
      %v923 = vshrl.u32 %v922, 7
      %v924 = vsub.s32 %v921, %v923
      %v925 = vrot.slane %v915, %v924
      %v927 = vunpack.c.l.s4 1966171168
      %v928 = vunpack.c.0.s8 %v927
      %v929 = vlaneseq
      %v930 = vshrl.u32 %v929, 7
      %v931 = vsub.s32 %v928, %v930
      %v932 = vrot.slane %v916, %v931
      %v934 = vunpack.c.l.s4 1966171168
      %v935 = vunpack.c.0.s8 %v934
      %v936 = vlaneseq
      %v937 = vshrl.u32 %v936, 7
      %v938 = vsub.s32 %v935, %v937
      %v939 = vrot.slane %v917, %v938
      %v941 = vunpack.c.l.s4 1966171168
      %v942 = vunpack.c.0.s8 %v941
      %v943 = vlaneseq
      %v944 = vshrl.u32 %v943, 7
      %v945 = vsub.s32 %v942, %v944
      %v946 = vrot.slane %v918, %v945
      %v947 = vcombine.low %v925, %v932
      %v948 = vcombine.low %v939, %v946
      %v950 = vunpack.c.l.s4 1966171168
      %v951 = vunpack.c.0.s8 %v950
      %v952 = vlaneseq
      %v953 = vshrl.u32 %v952, 7
      %v954 = vsub.s32 %v951, %v953
      %v955 = vrot.slane %v947, %v954
      %v957 = vunpack.c.l.s4 1966171168
      %v958 = vunpack.c.0.s8 %v957
      %v959 = vlaneseq
      %v960 = vshrl.u32 %v959, 7
      %v961 = vsub.s32 %v958, %v960
      %v962 = vrot.slane %v948, %v961
      %v963 = vcombine.low %v955, %v962
      %v965 = vsel %vm906, 0.0, %v963
      %966 = vst [vmem:[#allocation9] sm:$0xff] %v965
    $region25: #{tpu_custom_call.1} parent=1 // pred_fallthru
      _
    // Predicated region
    $region26: #{tpu_custom_call.1} parent=1 // pred_check
      _
    $region27: #{tpu_custom_call.1} parent=1 // pred_check_branch
      %968 = sbr.rel (0) target = $region29
    $region28: #{tpu_custom_call.1} parent=1 // pred_region
      %s970 = ssub.s32 128, 128
      %971 = vsyncadd [#allocation6], %s970
      %s973 = sshll.u32 [#allocation9], 4
      %s974 = int_to_ptr.vmem [resolvable:$true] %s973
      %976 = dma.vmem_to_hbm [thread:$0]  %s974, 128, %s2, [#allocation6]
    $region29: #{tpu_custom_call.1} parent=1 // pred_fallthru
      _
    // Predicated region
    $region30: #{tpu_custom_call.1} parent=1 // pred_check
      _
    $region31: #{tpu_custom_call.1} parent=1 // pred_check_branch
      %978 = sbr.rel (0) target = $region33
    $region32: #{tpu_custom_call.1} parent=1 // pred_region
      %979 = dma.done [#allocation6], 128
    $region33: #{tpu_custom_call.1} parent=1 // pred_fallthru
      _
    %980 = vsyncpa [#allocation5], 1
    %981 = vsyncpa [#allocation8], 1
    %982 = vsyncpa [#allocation6], 1

</llo_original>
